<compile_context>
chip_gen: v5e
topology: v5e:2x2
jax: 0.10.0
libtpu: 0.0.40
codegen_flags: <defaults>
</compile_context>

<pallas_src>
import functools

import jax
import jax.numpy as jnp
from jax import lax
from jax.experimental import pallas as pl
from jax.experimental.pallas import tpu as pltpu

MIN_DEPTH = 0.001
LANE = 128                 # minor (lane) dim of every block
DEFAULT_BLOCK_ROWS = 2048  # (2048, 128) f32 block = 1 MiB / input
NCORES = 2                 # leading 'parallel' axis (v7x has 2 TCs)


def _mae_log_kernel(rows, block_rows, bpc, needs_row_mask,
                    p_ref, g_ref, sum_ref, cnt_ref):
    """Accumulate masked |log(p+eps) - log(g+eps)| sum and mask count.

    sum_ref / cnt_ref: (1, 1, LANE) f32 per-core resident accumulators.
    """
    c = pl.program_id(0)   # core split ('parallel')
    i = pl.program_id(1)   # block stream ('arbitrary' reduction axis)

    @pl.when(i == 0)
    def _init():
        sum_ref[...] = jnp.zeros_like(sum_ref)
        cnt_ref[...] = jnp.zeros_like(cnt_ref)

    p = p_ref[...].astype(jnp.float32)
    g = g_ref[...].astype(jnp.float32)

    if needs_row_mask:
        # Global (unclamped) row index of every element of this block.  Rows >=
        # `rows` are either the ragged tail of the last block (padded/garbage
        # data) or a duplicated (index-clamped) block on the short core;
        # neutralize them BEFORE the logs so no NaN/garbage leaks in.  This
        # branch is skipped entirely (at trace time) for perfectly tiled grids.
        blk = c * bpc + i
        row = blk * block_rows + lax.broadcasted_iota(jnp.int32, p.shape, 0)
        inb = row < rows
        g = jnp.where(inb, g, 0.0)   # -> mask False for out-of-range elements
        p = jnp.where(inb, p, 1.0)   # -> keeps log() well defined on garbage

    mask = g > MIN_DEPTH                                    # (gt > MIN_DEPTH)
    p = jnp.maximum(p, 1e-6)                                # torch.clamp(pred, 1e-6)
    err = jnp.abs(jnp.log(p + 1e-6) - jnp.log(g + 1e-6))    # |log - log|
    err = jnp.where(mask, err, 0.0)                         # abs_err[mask]; also kills
                                                            # NaNs from gt <= 0

    # Per-lane partial sums: mostly VPU vadds across vregs, one tiny (1,128)
    # store per step.  No cross-lane (XLU) reduce inside the hot loop.
    sum_ref[...] += jnp.sum(err, axis=0, keepdims=True)[None]
    cnt_ref[...] += jnp.sum(mask.astype(jnp.float32), axis=0, keepdims=True)[None]


def _tail_terms(p, g):
    """Plain-JAX masked sum/count for the (< LANE elements) non-aligned tail."""
    g = g.astype(jnp.float32)
    p = jnp.maximum(p.astype(jnp.float32), 1e-6)
    mask = g > MIN_DEPTH
    err = jnp.abs(jnp.log(p + 1e-6) - jnp.log(g + 1e-6))
    return jnp.sum(jnp.where(mask, err, 0.0)), jnp.sum(mask.astype(jnp.float32))


def mae_log_loss(prediction, gt, *, block_rows=DEFAULT_BLOCK_ROWS, ncores=NCORES):
    """Pallas equivalent of MAE_log_loss.forward. Returns a scalar float32."""
    assert prediction.shape == gt.shape
    p = prediction.reshape(-1)
    g = gt.reshape(-1)
    n = p.size

    total_sum = jnp.float32(0.0)
    total_cnt = jnp.float32(0.0)

    n_main = (n // LANE) * LANE          # lane-aligned prefix handled by the kernel
    if n_main > 0:
        rows = n_main // LANE
        if n_main == n:
            p2 = p.reshape(rows, LANE)   # zero-copy reshape, no padding pass
            g2 = g.reshape(rows, LANE)
        else:
            p2 = lax.slice(p, (0,), (n_main,)).reshape(rows, LANE)
            g2 = lax.slice(g, (0,), (n_main,)).reshape(rows, LANE)

        # Block size: big for real inputs; full-extent for tiny ones.
        br = block_rows if rows >= block_rows else rows
        nblocks = pl.cdiv(rows, br)
        bpc = pl.cdiv(nblocks, ncores)   # blocks per core
        # Only pay for the in-kernel row mask when the tiling is ragged or a
        # core would get a duplicated (index-clamped) block.  Static decision.
        needs_row_mask = (rows % br != 0) or (nblocks % ncores != 0)

        def in_index(c, i):
            # Clamp so a duplicated step on the short core never DMAs a fully
            # out-of-bounds block; its contribution is zeroed in-kernel.
            return (jnp.minimum(c * bpc + i, nblocks - 1), 0)

        out_spec = pl.BlockSpec((1, 1, LANE), lambda c, i: (c, 0, 0))

        sums, cnts = pl.pallas_call(
            functools.partial(_mae_log_kernel, rows, br, bpc, needs_row_mask),
            out_shape=(
                jax.ShapeDtypeStruct((ncores, 1, LANE), jnp.float32),
                jax.ShapeDtypeStruct((ncores, 1, LANE), jnp.float32),
            ),
            grid_spec=pltpu.PrefetchScalarGridSpec(
                num_scalar_prefetch=0,
                grid=(ncores, bpc),
                in_specs=[pl.BlockSpec((br, LANE), in_index),
                          pl.BlockSpec((br, LANE), in_index)],
                out_specs=[out_spec, out_spec],
            ),
            compiler_params=pltpu.CompilerParams(
                dimension_semantics=("parallel", "arbitrary"),
            ),
        )(p2, g2)

        total_sum = total_sum + jnp.sum(sums)
        total_cnt = total_cnt + jnp.sum(cnts)

    if n_main < n:                       # < 128 leftover elements: plain JAX
        s, c = _tail_terms(p[n_main:], g[n_main:])
        total_sum = total_sum + s
        total_cnt = total_cnt + c

    # mean over selected elements (NaN if the mask selects nothing, matching
    # torch.mean over an empty selection)
    return (total_sum / total_cnt).astype(jnp.float32)


if __name__ == "__main__":
    def reference(prediction, gt):
        p = jnp.maximum(prediction.astype(jnp.float32), 1e-6)
        g = gt.astype(jnp.float32)
        err = jnp.abs(jnp.log(p + 1e-6) - jnp.log(g + 1e-6))
        m = g > MIN_DEPTH
        return jnp.sum(jnp.where(m, err, 0.0)) / jnp.sum(m)

    key = jax.random.PRNGKey(0)
    loss_fn = jax.jit(mae_log_loss)

    # depth-map-like inputs: (batch, channels=1, H, W).  The second shape
    # exercises the ragged / non-lane-aligned tail path, the first the
    # perfectly tiled fast path (no in-kernel row mask).
    for shape in [(2, 1, 32, 32), (2, 1, 31, 29)]:
        key, k1, k2, k3 = jax.random.split(key, 4)
        prediction = jax.random.uniform(k1, shape, dtype=jnp.float32, maxval=5.0)
        gt = jax.random.uniform(k2, shape, dtype=jnp.float32, maxval=5.0)
        # zero out ~25% of gt so the (gt > MIN_DEPTH) mask is non-trivial
        gt = jnp.where(jax.random.uniform(k3, shape) < 0.25, 0.0, gt)

        loss = loss_fn(prediction, gt)
        jax.block_until_ready(loss)
        ref = reference(prediction, gt)
        assert jnp.allclose(loss, ref, rtol=1e-5, atol=1e-5), (shape, loss, ref)

    print("KERNEL_OK")
</pallas_src>

<mosaic_0001>
module attributes {stable_mosaic.version = 11 : i64} {
  func.func @_mae_log_kernel(%arg0: i32, %arg1: i32, %arg2: memref<16x128xf32, #tpu.memory_space<vmem>>, %arg3: memref<16x128xf32, #tpu.memory_space<vmem>>, %arg4: memref<1x1x128xf32, #tpu.memory_space<vmem>>, %arg5: memref<1x1x128xf32, #tpu.memory_space<vmem>>) attributes {dimension_semantics = [#tpu.dimension_semantics<parallel>, #tpu.dimension_semantics<arbitrary>], iteration_bounds = array<i64: 2, 1>, scalar_prefetch = 0 : i64, scratch_operands = 0 : i64, tpu.core_type = #tpu.core_type<tc>, window_params = [{transform_indices = @transform_0, window_bounds = array<i64: 16, 128>}, {transform_indices = @transform_1, window_bounds = array<i64: 16, 128>}, {transform_indices = @transform_2, window_bounds = array<i64: 1, 1, 128>}, {transform_indices = @transform_3, window_bounds = array<i64: 1, 1, 128>}]} {
    %c0_i32 = arith.constant 0 : i32
    %0 = arith.cmpi eq, %arg1, %c0_i32 : i32
    %1 = arith.extui %0 : i1 to i32
    %c0_i32_0 = arith.constant 0 : i32
    %2 = arith.cmpi ne, %1, %c0_i32_0 : i32
    scf.if %2 {
      %cst_25 = arith.constant 0.000000e+00 : f32
      %45 = vector.broadcast %cst_25 : f32 to vector<1x1x128xf32>
      %c0_26 = arith.constant 0 : index
      %c0_27 = arith.constant 0 : index
      %c0_28 = arith.constant 0 : index
      %46 = vector.load %arg4[%c0_26, %c0_27, %c0_28] : memref<1x1x128xf32, #tpu.memory_space<vmem>>, vector<1x1x128xf32>
      tpu.vector_store %arg4[%c0_26, %c0_27, %c0_28], %45 {strides = array<i32>} : memref<1x1x128xf32, #tpu.memory_space<vmem>>, vector<1x1x128xf32>,
      %cst_29 = arith.constant 0.000000e+00 : f32
      %47 = vector.broadcast %cst_29 : f32 to vector<1x1x128xf32>
      %c0_30 = arith.constant 0 : index
      %c0_31 = arith.constant 0 : index
      %c0_32 = arith.constant 0 : index
      %48 = vector.load %arg5[%c0_30, %c0_31, %c0_32] : memref<1x1x128xf32, #tpu.memory_space<vmem>>, vector<1x1x128xf32>
      tpu.vector_store %arg5[%c0_30, %c0_31, %c0_32], %47 {strides = array<i32>} : memref<1x1x128xf32, #tpu.memory_space<vmem>>, vector<1x1x128xf32>,
    } else {
    }
    %c0 = arith.constant 0 : index
    %c0_1 = arith.constant 0 : index
    %3 = vector.load %arg2[%c0, %c0_1] : memref<16x128xf32, #tpu.memory_space<vmem>>, vector<16x128xf32>
    %c0_2 = arith.constant 0 : index
    %c0_3 = arith.constant 0 : index
    %4 = vector.load %arg3[%c0_2, %c0_3] : memref<16x128xf32, #tpu.memory_space<vmem>>, vector<16x128xf32>
    %c1_i32 = arith.constant 1 : i32
    %5 = arith.muli %arg0, %c1_i32 : i32
    %6 = arith.addi %5, %arg1 : i32
    %c16_i32 = arith.constant 16 : i32
    %7 = arith.muli %6, %c16_i32 : i32
    %8 = tpu.iota {dimensions = array<i32: 0>} : vector<16x128xi32>
    %9 = vector.broadcast %7 : i32 to vector<16x128xi32>
    %10 = arith.addi %9, %8 : vector<16x128xi32>
    %c16_i32_4 = arith.constant 16 : i32
    %11 = vector.broadcast %c16_i32_4 : i32 to vector<16x128xi32>
    %12 = arith.cmpi slt, %10, %11 : vector<16x128xi32>
    %cst = arith.constant 0.000000e+00 : f32
    %13 = vector.broadcast %cst : f32 to vector<16x128xf32>
    %14 = arith.select %12, %4, %13 : vector<16x128xi1>, vector<16x128xf32>
    %cst_5 = arith.constant 1.000000e+00 : f32
    %15 = vector.broadcast %cst_5 : f32 to vector<16x128xf32>
    %16 = arith.select %12, %3, %15 : vector<16x128xi1>, vector<16x128xf32>
    %cst_6 = arith.constant 1.000000e-03 : f32
    %17 = vector.broadcast %cst_6 : f32 to vector<16x128xf32>
    %18 = arith.cmpf ogt, %14, %17 : vector<16x128xf32>
    %cst_7 = arith.constant 9.99999997E-7 : f32
    %19 = vector.broadcast %cst_7 : f32 to vector<16x128xf32>
    %20 = arith.maximumf %16, %19 : vector<16x128xf32>
    %cst_8 = arith.constant 9.99999997E-7 : f32
    %21 = vector.broadcast %cst_8 : f32 to vector<16x128xf32>
    %22 = arith.addf %20, %21 : vector<16x128xf32>
    %23 = math.log %22 : vector<16x128xf32>
    %cst_9 = arith.constant 9.99999997E-7 : f32
    %24 = vector.broadcast %cst_9 : f32 to vector<16x128xf32>
    %25 = arith.addf %14, %24 : vector<16x128xf32>
    %26 = math.log %25 : vector<16x128xf32>
    %27 = arith.subf %23, %26 : vector<16x128xf32>
    %28 = math.absf %27 : vector<16x128xf32>
    %cst_10 = arith.constant 0.000000e+00 : f32
    %29 = vector.broadcast %cst_10 : f32 to vector<16x128xf32>
    %30 = arith.select %18, %28, %29 : vector<16x128xi1>, vector<16x128xf32>
    %c0_11 = arith.constant 0 : index
    %c0_12 = arith.constant 0 : index
    %c0_13 = arith.constant 0 : index
    %31 = vector.load %arg4[%c0_11, %c0_12, %c0_13] : memref<1x1x128xf32, #tpu.memory_space<vmem>>, vector<1x1x128xf32>
    %cst_14 = arith.constant dense<0.000000e+00> : vector<128xf32>
    %32 = vector.multi_reduction <add>, %30, %cst_14 [0] : vector<16x128xf32> to vector<128xf32>
    %33 = vector.shape_cast %32 : vector<128xf32> to vector<1x128xf32>
    %34 = vector.shape_cast %33 : vector<1x128xf32> to vector<1x1x128xf32>
    %35 = arith.addf %31, %34 : vector<1x1x128xf32>
    %c0_15 = arith.constant 0 : index
    %c0_16 = arith.constant 0 : index
    %c0_17 = arith.constant 0 : index
    %36 = vector.load %arg4[%c0_15, %c0_16, %c0_17] : memref<1x1x128xf32, #tpu.memory_space<vmem>>, vector<1x1x128xf32>
    tpu.vector_store %arg4[%c0_15, %c0_16, %c0_17], %35 {strides = array<i32>} : memref<1x1x128xf32, #tpu.memory_space<vmem>>, vector<1x1x128xf32>,
    %c0_18 = arith.constant 0 : index
    %c0_19 = arith.constant 0 : index
    %c0_20 = arith.constant 0 : index
    %37 = vector.load %arg5[%c0_18, %c0_19, %c0_20] : memref<1x1x128xf32, #tpu.memory_space<vmem>>, vector<1x1x128xf32>
    %38 = arith.extui %18 : vector<16x128xi1> to vector<16x128xi32>
    %39 = arith.sitofp %38 : vector<16x128xi32> to vector<16x128xf32>
    %cst_21 = arith.constant dense<0.000000e+00> : vector<128xf32>
    %40 = vector.multi_reduction <add>, %39, %cst_21 [0] : vector<16x128xf32> to vector<128xf32>
    %41 = vector.shape_cast %40 : vector<128xf32> to vector<1x128xf32>
    %42 = vector.shape_cast %41 : vector<1x128xf32> to vector<1x1x128xf32>
    %43 = arith.addf %37, %42 : vector<1x1x128xf32>
    %c0_22 = arith.constant 0 : index
    %c0_23 = arith.constant 0 : index
    %c0_24 = arith.constant 0 : index
    %44 = vector.load %arg5[%c0_22, %c0_23, %c0_24] : memref<1x1x128xf32, #tpu.memory_space<vmem>>, vector<1x1x128xf32>
    tpu.vector_store %arg5[%c0_22, %c0_23, %c0_24], %43 {strides = array<i32>} : memref<1x1x128xf32, #tpu.memory_space<vmem>>, vector<1x1x128xf32>,
    return
  }
  func.func @transform_0(%arg0: i32, %arg1: i32) -> (i32, i32) {
    %c1_i32 = arith.constant 1 : i32
    %0 = arith.muli %arg0, %c1_i32 : i32
    %1 = arith.addi %0, %arg1 : i32
    %c0_i32 = arith.constant 0 : i32
    %2 = arith.minsi %1, %c0_i32 : i32
    %c0_i32_0 = arith.constant 0 : i32
    %c0_i32_1 = arith.constant 0 : i32
    return %2, %c0_i32_0 : i32, i32
  }
  func.func @transform_1(%arg0: i32, %arg1: i32) -> (i32, i32) {
    %c1_i32 = arith.constant 1 : i32
    %0 = arith.muli %arg0, %c1_i32 : i32
    %1 = arith.addi %0, %arg1 : i32
    %c0_i32 = arith.constant 0 : i32
    %2 = arith.minsi %1, %c0_i32 : i32
    %c0_i32_0 = arith.constant 0 : i32
    %c0_i32_1 = arith.constant 0 : i32
    return %2, %c0_i32_0 : i32, i32
  }
  func.func @transform_2(%arg0: i32, %arg1: i32) -> (i32, i32, i32) {
    %c0_i32 = arith.constant 0 : i32
    %c0_i32_0 = arith.constant 0 : i32
    %c0_i32_1 = arith.constant 0 : i32
    return %arg0, %c0_i32, %c0_i32_0 : i32, i32, i32
  }
  func.func @transform_3(%arg0: i32, %arg1: i32) -> (i32, i32, i32) {
    %c0_i32 = arith.constant 0 : i32
    %c0_i32_0 = arith.constant 0 : i32
    %c0_i32_1 = arith.constant 0 : i32
    return %arg0, %c0_i32, %c0_i32_0 : i32, i32, i32
  }
}

</mosaic_0001>

<llo_original>
// kernel: mae_log_loss.1
$region0: #{mae_log_loss.1}
  #allocation0 [shape = 'u32[]', space=smem, size = 0x4, offset = 0x4, fixed_abs, tag = 'smem constant byte address 0x4 - core index']
  #allocation1 [shape = 'u32[72,128]{1,0:T(1,128)}', space=vmem, size = 0x9000, scoped, tag = 'internal scratch']
  %s0 = inlined_call_operand.vmem [shape: f32[16,128], index: 0, kind: input, shape index: {}]
  %s1 = inlined_call_operand.vmem [shape: f32[16,128], index: 1, kind: input, shape index: {}]
  %s2 = inlined_call_operand.vmem [shape: f32[2,1,128], index: 2, kind: output, shape index: {0}]
  %s3 = inlined_call_operand.vmem [shape: f32[2,1,128], index: 3, kind: output, shape index: {1}]
  %4 = xla_tuple %s2, %s3
  %s5 = sld [smem:[#allocation0]]
  $region53: #{mae_log_loss.1} parent=0
    _
  %s7 = ssub.s32 1, %s5
  %s8 = scalar_select 0, %s7, %s5
  loop: start=0, step=1, limit=4
  $region2: #{mae_log_loss.1} parent=0 // loop_pre_header
    _
  $region3: #{mae_log_loss.1} parent=0 // loop_header
    %s10 = sphi 0, %s14
    %p11 = scmp.ge.s32.totalorder %s10, 4
    %s17 = sphi 0, %s29
    %s18 = sphi 0, %s25
    %s19 = sphi 0, %s17
    %s20 = sphi 0, %s18
    %s21 = sphi 0, %s19
    %s22 = sphi 0, %s20
    %s38 = sphi 0, %s40
    %s41 = sphi 0, %s38
    %s42 = sphi 0, %s41
    %s58 = sphi 0, %s42
    %s70 = sphi 0, %s72
    %s73 = sphi 0, %s70
    %s74 = sphi 0, %s73
    %s90 = sphi 0, %s74
    %s96 = sphi 0, %s98
    %s99 = sphi 0, %s96
    %s100 = sphi 0, %s99
    %s116 = sphi 0, %s100
    %s122 = sphi 0, %s124
    %s125 = sphi 0, %s122
    %s126 = sphi 0, %s125
    %s142 = sphi 0, %s126
  $region4: #{mae_log_loss.1} parent=0 // loop_header_branch
    %13 = sbr.rel (%p11) target = $region8
  $region5: #{mae_log_loss.1} parent=0 // loop_body
    %s15 = ssub.s32 %s10, 1
    %s16 = ssub.s32 %s10, 2
    %s23 = sadd.s32 1, %s18
    %p24 = scmp.ge.s32.totalorder %s23, 1
    %s25 = scalar_select %p24, 0, %s23
    %s26 = sadd.s32 1, %s17
    %s27 = scalar_select %p24, %s26, %s17
    %p28 = scmp.ge.s32.totalorder %s27, 2
    %s29 = scalar_select %p28, 0, %s27
    %s30 = sadd.s32 %s17, %s18
    %p31 = scmp.lt.s32.totalorder %s30, 0
    %s32 = scalar_select %p31, %s30, 0
    %s33 = sadd.s32 %s29, %s25
    %p34 = scmp.lt.s32.totalorder %s33, 0
    %s35 = scalar_select %p34, %s33, 0
    %s36 = ssub.s32 %s32, %s35
    %p37 = scmp.eq.s32.totalorder %s36, 0
    %s39 = sadd.s32 %s38, 1
    %s40 = scalar_select %p37, %s38, %s39
    %p43 = pneg %p37
    %p44 = scmp.eq.s32.totalorder %s10, 1
    %p45 = por %p43, %p44
    %p46 = scmp.ne.s32.totalorder %s38, %s41
    %p47 = scmp.eq.s32.totalorder %s10, 0
    %p48 = por %p46, %p47
    %p49 = scmp.ne.s32.totalorder %s38, %s41
    %p50 = scmp.eq.s32.totalorder %s15, 1
    %p51 = por %p49, %p50
    %p52 = scmp.ne.s32.totalorder %s41, %s42
    %p53 = scmp.eq.s32.totalorder %s15, 0
    %p54 = por %p52, %p53
    %p55 = scmp.ne.s32.totalorder %s41, %s42
    %p56 = scmp.eq.s32.totalorder %s16, 1
    %p57 = por %p55, %p56
    %p59 = scmp.ne.s32.totalorder %s42, %s58
    %p60 = scmp.eq.s32.totalorder %s16, 0
    %p61 = por %p59, %p60
    %s62 = sadd.s32 %s17, %s18
    %p63 = scmp.lt.s32.totalorder %s62, 0
    %s64 = scalar_select %p63, %s62, 0
    %s65 = sadd.s32 %s29, %s25
    %p66 = scmp.lt.s32.totalorder %s65, 0
    %s67 = scalar_select %p66, %s65, 0
    %s68 = ssub.s32 %s64, %s67
    %p69 = scmp.eq.s32.totalorder %s68, 0
    %s71 = sadd.s32 %s70, 1
    %s72 = scalar_select %p69, %s70, %s71
    %p75 = pneg %p69
    %p76 = scmp.eq.s32.totalorder %s10, 1
    %p77 = por %p75, %p76
    %p78 = scmp.ne.s32.totalorder %s70, %s73
    %p79 = scmp.eq.s32.totalorder %s10, 0
    %p80 = por %p78, %p79
    %p81 = scmp.ne.s32.totalorder %s70, %s73
    %p82 = scmp.eq.s32.totalorder %s15, 1
    %p83 = por %p81, %p82
    %p84 = scmp.ne.s32.totalorder %s73, %s74
    %p85 = scmp.eq.s32.totalorder %s15, 0
    %p86 = por %p84, %p85
    %p87 = scmp.ne.s32.totalorder %s73, %s74
    %p88 = scmp.eq.s32.totalorder %s16, 1
    %p89 = por %p87, %p88
    %p91 = scmp.ne.s32.totalorder %s74, %s90
    %p92 = scmp.eq.s32.totalorder %s16, 0
    %p93 = por %p91, %p92
    %s94 = ssub.s32 %s17, %s29
    %p95 = scmp.eq.s32.totalorder %s94, 0
    %s97 = sadd.s32 %s96, 1
    %s98 = scalar_select %p95, %s96, %s97
    %p101 = pneg %p95
    %p102 = scmp.eq.s32.totalorder %s10, 1
    %p103 = por %p101, %p102
    %p104 = scmp.ne.s32.totalorder %s96, %s99
    %p105 = scmp.eq.s32.totalorder %s10, 0
    %p106 = por %p104, %p105
    %p107 = scmp.ne.s32.totalorder %s96, %s99
    %p108 = scmp.eq.s32.totalorder %s15, 1
    %p109 = por %p107, %p108
    %p110 = scmp.ne.s32.totalorder %s99, %s100
    %p111 = scmp.eq.s32.totalorder %s15, 0
    %p112 = por %p110, %p111
    %p113 = scmp.ne.s32.totalorder %s99, %s100
    %p114 = scmp.eq.s32.totalorder %s16, 1
    %p115 = por %p113, %p114
    %p117 = scmp.ne.s32.totalorder %s100, %s116
    %p118 = scmp.eq.s32.totalorder %s16, 0
    %p119 = por %p117, %p118
    %s120 = ssub.s32 %s17, %s29
    %p121 = scmp.eq.s32.totalorder %s120, 0
    %s123 = sadd.s32 %s122, 1
    %s124 = scalar_select %p121, %s122, %s123
    %p127 = pneg %p121
    %p128 = scmp.eq.s32.totalorder %s10, 1
    %p129 = por %p127, %p128
    %p130 = scmp.ne.s32.totalorder %s122, %s125
    %p131 = scmp.eq.s32.totalorder %s10, 0
    %p132 = por %p130, %p131
    %p133 = scmp.ne.s32.totalorder %s122, %s125
    %p134 = scmp.eq.s32.totalorder %s15, 1
    %p135 = por %p133, %p134
    %p136 = scmp.ne.s32.totalorder %s125, %s126
    %p137 = scmp.eq.s32.totalorder %s15, 0
    %p138 = por %p136, %p137
    %p139 = scmp.ne.s32.totalorder %s125, %s126
    %p140 = scmp.eq.s32.totalorder %s16, 1
    %p141 = por %p139, %p140
    %p143 = scmp.ne.s32.totalorder %s126, %s142
    %p144 = scmp.eq.s32.totalorder %s16, 0
    %p145 = por %p143, %p144
    %p146 = scmp.le.s32.totalorder 1, %s10
    %p147 = scmp.lt.s32.totalorder %s10, 3
    %p148 = pnand %p146, %p147
    %p149 = pneg %p148
    // Predicated region
    $region9: #{mae_log_loss.1} parent=5 // pred_check
      _
    $region10: #{mae_log_loss.1} parent=5 // pred_check_branch
      %151 = sbr.rel (%p148) target = $region12
    $region11: #{mae_log_loss.1} parent=5 // pred_region
      %s152 = ssub.s32 %s10, 1
    $region12: #{mae_log_loss.1} parent=5 // pred_fallthru
      _
    %p153 = scmp.lt.s32.totalorder %s10, 2
    // Predicated region
    $region13: #{mae_log_loss.1} parent=5 // pred_check
      %p154 = pneg %p153
    $region14: #{mae_log_loss.1} parent=5 // pred_check_branch
      %156 = sbr.rel (%p154) target = $region16
    $region15: #{mae_log_loss.1} parent=5 // pred_region
      // Predicated region
      $region17: #{mae_log_loss.1} parent=15 // pred_check
        %p157 = pneg %p48
      $region18: #{mae_log_loss.1} parent=15 // pred_check_branch
        %159 = sbr.rel (%p157) target = $region20
      $region19: #{mae_log_loss.1} parent=15 // pred_region
        %s160 = sadd.s32 %s17, %s18
        %p161 = scmp.lt.s32.totalorder %s160, 0
        %s162 = scalar_select %p161, %s160, 0
        %s163 = smul.u32 2, %s162
        %p164 = scmp.lt.s32.totalorder %s163, 1
        %s165 = scalar_select %p164, %s163, 1
        %s166 = smul.addr %s165, 8
        %s167 = scalar_lea.vmem %s0, %s166
        %s168 = sadd.s32 %s17, %s18
        %p169 = scmp.lt.s32.totalorder %s168, 0
        %s170 = scalar_select %p169, %s168, 0
        %s171 = smul.u32 2, %s170
      $region20: #{mae_log_loss.1} parent=15 // pred_fallthru
        _
      // Predicated region
      $region21: #{mae_log_loss.1} parent=15 // pred_check
        %p172 = pneg %p80
      $region22: #{mae_log_loss.1} parent=15 // pred_check_branch
        %174 = sbr.rel (%p172) target = $region24
      $region23: #{mae_log_loss.1} parent=15 // pred_region
        %s175 = sadd.s32 %s17, %s18
        %p176 = scmp.lt.s32.totalorder %s175, 0
        %s177 = scalar_select %p176, %s175, 0
        %s178 = smul.u32 2, %s177
        %p179 = scmp.lt.s32.totalorder %s178, 1
        %s180 = scalar_select %p179, %s178, 1
        %s181 = smul.addr %s180, 8
        %s182 = scalar_lea.vmem %s1, %s181
        %s183 = sadd.s32 %s17, %s18
        %p184 = scmp.lt.s32.totalorder %s183, 0
        %s185 = scalar_select %p184, %s183, 0
        %s186 = smul.u32 2, %s185
      $region24: #{mae_log_loss.1} parent=15 // pred_fallthru
        _
    $region16: #{mae_log_loss.1} parent=5 // pred_fallthru
      _
    %p187 = scmp.le.s32.totalorder 1, %s10
    %p188 = scmp.lt.s32.totalorder %s10, 3
    %p189 = pnand %p187, %p188
    %p190 = pneg %p189
    // Predicated region
    $region25: #{mae_log_loss.1} parent=5 // pred_check
      _
    $region26: #{mae_log_loss.1} parent=5 // pred_check_branch
      %192 = sbr.rel (%p189) target = $region28
    $region27: #{mae_log_loss.1} parent=5 // pred_region
      %s193 = ssub.s32 %s10, 1
      %s194 = sadd.s32 %s19, %s20
      %p195 = scmp.lt.s32.totalorder %s194, 0
      %s196 = scalar_select %p195, %s194, 0
      %s197 = smul.u32 2, %s196
      %p198 = scmp.lt.s32.totalorder %s197, 1
      %s199 = scalar_select %p198, %s197, 1
      %s200 = smul.addr %s199, 8
      %s201 = scalar_lea.vmem %s0, %s200
      %p202 = pneg %p54
      %p203 = pneg %p51
      %s204 = sadd.s32 %s19, %s20
      %p205 = scmp.lt.s32.totalorder %s204, 0
      %s206 = scalar_select %p205, %s204, 0
      %s207 = smul.u32 2, %s206
      %p208 = scmp.lt.s32.totalorder %s207, 1
      %s209 = scalar_select %p208, %s207, 1
      %s210 = smul.addr %s209, 8
      %s211 = scalar_lea.vmem %s1, %s210
      %p212 = pneg %p86
      %p213 = pneg %p83
      %p214 = pneg %p112
      %p215 = pneg %p109
      %p216 = scmp.lt.s32.totalorder %s19, 1
      %s217 = scalar_select %p216, %s19, 1
      %s218 = scalar_lea.vmem %s2, %s217
      %p219 = pneg %p138
      %p220 = pneg %p135
      %p221 = scmp.lt.s32.totalorder %s19, 1
      %s222 = scalar_select %p221, %s19, 1
      %s223 = scalar_lea.vmem %s3, %s222
      %s224 = sadd.s32 %s19, %s20
      %p225 = scmp.lt.s32.totalorder %s224, 0
      %s226 = scalar_select %p225, %s224, 0
      %s227 = smul.u32 2, %s226
      %p228 = scmp.lt.s32.totalorder %s227, 1
      %s229 = scalar_select %p228, %s227, 1
      %s230 = smul.addr %s229, 8
      %s231 = scalar_lea.vmem %s0, %s230
      %s232 = sadd.s32 %s19, %s20
      %p233 = scmp.lt.s32.totalorder %s232, 0
      %s234 = scalar_select %p233, %s232, 0
      %s235 = smul.u32 2, %s234
      %s236 = sadd.s32 %s19, %s20
      %p237 = scmp.lt.s32.totalorder %s236, 0
      %s238 = scalar_select %p237, %s236, 0
      %s239 = smul.u32 2, %s238
      %p240 = scmp.lt.s32.totalorder %s239, 1
      %s241 = scalar_select %p240, %s239, 1
      %s242 = smul.addr %s241, 8
      %s243 = scalar_lea.vmem %s1, %s242
      %s244 = sadd.s32 %s19, %s20
      %p245 = scmp.lt.s32.totalorder %s244, 0
      %s246 = scalar_select %p245, %s244, 0
      %s247 = smul.u32 2, %s246
      %p248 = scmp.lt.s32.totalorder %s19, 1
      %s249 = scalar_select %p248, %s19, 1
      %s250 = scalar_lea.vmem %s2, %s249
      %p251 = scmp.lt.s32.totalorder %s19, 1
      %s252 = scalar_select %p251, %s19, 1
      %s253 = scalar_lea.vmem %s3, %s252
      %p254 = scmp.eq.s32.totalorder %s20, 0
      // Predicated region
      $region29: #{mae_log_loss.1} parent=27 // pred_check
        %p255 = pneg %p254
      $region30: #{mae_log_loss.1} parent=27 // pred_check_branch
        %257 = sbr.rel (%p255) target = $region32
      $region31: #{mae_log_loss.1} parent=27 // pred_region
        %258 = vst [vmem:[%s250] sm:$0x1] 0.0
        %259 = vst [vmem:[%s253] sm:$0x1] 0.0
      $region32: #{mae_log_loss.1} parent=27 // pred_fallthru
        _
      %v260 = vld [vmem:[%s231] sm:$0xff]
      %v261 = vld [vmem:[%s231 + $0x8] sm:$0xff]
      %v262 = vld [vmem:[%s243] sm:$0xff]
      %v263 = vld [vmem:[%s243 + $0x8] sm:$0xff]
      %s264 = sadd.s32 %s19, %s20
      %s265 = smul.u32 %s264, 16
      %v266 = vlaneseq
      %v267 = vshrl.u32 %v266, 7
      %v268 = vadd.s32 %v267, 8
      %v269 = vstv %s265
      %v270 = vadd.s32 %v269, %v267
      %v271 = vadd.s32 %v269, %v268
      %vm272 = vcmp.lt.s32.totalorder %v270, 16
      %vm273 = vcmp.lt.s32.totalorder %v271, 16
      %v274 = vsel %vm272, %v262, 0.0
      %v275 = vsel %vm273, %v263, 0.0
      %v276 = vsel %vm272, %v260, 1.0
      %v277 = vsel %vm273, %v261, 1.0
      %vm278 = vcmp.gt.f32.partialorder %v274, 0.001
      %vm279 = vcmp.gt.f32.partialorder %v275, 0.001
      %v280 = vmax.f32 %v276, 1e-06
      %v281 = vmax.f32 %v277, 1e-06
      %v282 = vadd.f32 %v280, 1e-06
      %v283 = vadd.f32 %v281, 1e-06
      %v284 = vlog2.pop %v282
      %v285 = vmul.f32 %v284, 0.6931472
      %v286 = vlog2.pop %v283
      %v287 = vmul.f32 %v286, 0.6931472
      %v288 = vadd.f32 %v274, 1e-06
      %v289 = vadd.f32 %v275, 1e-06
      %v290 = vlog2.pop %v288
      %v291 = vmul.f32 %v290, 0.6931472
      %v292 = vlog2.pop %v289
      %v293 = vmul.f32 %v292, 0.6931472
      %v294 = vsub.f32 %v285, %v291
      %v295 = vsub.f32 %v287, %v293
      %v296 = vand.u32 2147483647, %v294
      %v297 = vand.u32 2147483647, %v295
      %v298 = vsel %vm278, %v296, 0.0
      %v299 = vsel %vm279, %v297, 0.0
      %v300 = vld [vmem:[%s250] sm:$0x1]
      %v301 = vadd.f32 %v298, %v299
      %v302 = vrot.slane %v301, 4
      %v303 = vadd.f32 %v301, %v302
      %v304 = vrot.slane %v303, 2
      %v305 = vadd.f32 %v303, %v304
      %v306 = vrot.slane %v305, 1
      %v307 = vadd.f32 %v305, %v306
      %v308 = vadd.f32 %v300, %v307
      %309 = vst [vmem:[%s250] sm:$0x1] %v308
      %v310 = vld [vmem:[%s253] sm:$0x1]
      %v311 = vsel %vm278, 1, 0
      %v312 = vsel %vm279, 1, 0
      %v313 = vcvt.s32.f32 %v311
      %v314 = vcvt.s32.f32 %v312
      %v315 = vadd.f32 %v313, %v314
      %v316 = vrot.slane %v315, 4
      %v317 = vadd.f32 %v315, %v316
      %v318 = vrot.slane %v317, 2
      %v319 = vadd.f32 %v317, %v318
      %v320 = vrot.slane %v319, 1
      %v321 = vadd.f32 %v319, %v320
      %v322 = vadd.f32 %v310, %v321
      %323 = vst [vmem:[%s253] sm:$0x1] %v322
      %p324 = scmp.lt.s32.totalorder %s19, 1
      %s325 = scalar_select %p324, %s19, 1
      %s326 = scalar_lea.vmem %s2, %s325
      %p327 = scmp.lt.s32.totalorder %s19, 1
      %s328 = scalar_select %p327, %s19, 1
      %s329 = scalar_lea.vmem %s3, %s328
      // Predicated region
      $region33: #{mae_log_loss.1} parent=27 // pred_check
        %p330 = pneg %p109
      $region34: #{mae_log_loss.1} parent=27 // pred_check_branch
        %332 = sbr.rel (%p330) target = $region36
      $region35: #{mae_log_loss.1} parent=27 // pred_region
        _
      $region36: #{mae_log_loss.1} parent=27 // pred_fallthru
        _
      // Predicated region
      $region37: #{mae_log_loss.1} parent=27 // pred_check
        %p333 = pneg %p135
      $region38: #{mae_log_loss.1} parent=27 // pred_check_branch
        %335 = sbr.rel (%p333) target = $region40
      $region39: #{mae_log_loss.1} parent=27 // pred_region
        _
      $region40: #{mae_log_loss.1} parent=27 // pred_fallthru
        _
    $region28: #{mae_log_loss.1} parent=5 // pred_fallthru
      _
    %p336 = scmp.le.s32.totalorder 2, %s10
    // Predicated region
    $region41: #{mae_log_loss.1} parent=5 // pred_check
      %p337 = pneg %p336
    $region42: #{mae_log_loss.1} parent=5 // pred_check_branch
      %339 = sbr.rel (%p337) target = $region44
    $region43: #{mae_log_loss.1} parent=5 // pred_region
      %s340 = ssub.s32 %s10, 2
      // Predicated region
      $region45: #{mae_log_loss.1} parent=43 // pred_check
        %p341 = pneg %p115
      $region46: #{mae_log_loss.1} parent=43 // pred_check_branch
        %343 = sbr.rel (%p341) target = $region48
      $region47: #{mae_log_loss.1} parent=43 // pred_region
        %p344 = scmp.lt.s32.totalorder %s21, 1
        %s345 = scalar_select %p344, %s21, 1
        %s346 = scalar_lea.vmem %s2, %s345
      $region48: #{mae_log_loss.1} parent=43 // pred_fallthru
        _
      // Predicated region
      $region49: #{mae_log_loss.1} parent=43 // pred_check
        %p347 = pneg %p141
      $region50: #{mae_log_loss.1} parent=43 // pred_check_branch
        %349 = sbr.rel (%p347) target = $region52
      $region51: #{mae_log_loss.1} parent=43 // pred_region
        %p350 = scmp.lt.s32.totalorder %s21, 1
        %s351 = scalar_select %p350, %s21, 1
        %s352 = scalar_lea.vmem %s3, %s351
      $region52: #{mae_log_loss.1} parent=43 // pred_fallthru
        _
    $region44: #{mae_log_loss.1} parent=5 // pred_fallthru
      _
  $region6: #{mae_log_loss.1} parent=0 // loop_footer
    %s14 = sadd.s32 1, %s10
  $region7: #{mae_log_loss.1} parent=0 // loop_footer_branch
    %9 = sbr.rel target = $region3
  $region8: #{mae_log_loss.1} parent=0 // loop_exit
    _

</llo_original>
